<compile_context>
chip_gen: v5e
topology: v5e:2x2
jax: 0.10.0
libtpu: 0.0.40
codegen_flags: <defaults>
</compile_context>

<pallas_src>
import jax
import jax.numpy as jnp
from jax.experimental import pallas as pl
from jax.experimental.pallas import tpu as pltpu

LANES = 128          # every feature dim is padded to one full lane width
H1, H2, OUT = 16, 32, 32
TILE_CAP = 4096      # max batch rows per grid step (fits default scoped VMEM on all gens)


def fused_mlp_kernel(x_ref, w_ref, o_ref):
    """Three stacked relu(x @ W) layers; biases ride a constant-1 lane inside W.

    x_ref : (block_b, 128)   packed [x1 | x2 | 1 | 0...]
    w_ref : (3, 128, 128)    block-diag layer weights with biases folded into the constant row
    o_ref : (block_b, 128)   columns 0..31 hold the module output, rest are 0
    """
    cd = w_ref.dtype                       # compute dtype for MXU inputs (f32, or bf16 opt-in)
    h = x_ref[...].astype(cd)
    h = jnp.maximum(jnp.dot(h, w_ref[0], preferred_element_type=jnp.float32), 0.0)
    h = jnp.maximum(jnp.dot(h.astype(cd), w_ref[1], preferred_element_type=jnp.float32), 0.0)
    h = jnp.maximum(jnp.dot(h.astype(cd), w_ref[2], preferred_element_type=jnp.float32), 0.0)
    o_ref[...] = h.astype(o_ref.dtype)


def pack_params(params, d1, d2, dtype=jnp.float32):
    """Pack the 10 Linear params into one (3,128,128) weight slab with biases folded in.

    Call this ONCE at init (it is a handful of one-time scatters), not inside the hot forward.
    Constant-1 lane positions: input lane d1+d2, post-layer-1 lane 32, post-layer-2 lane 64.
    """
    (w1a, b1a, w1b, b1b, w2a, b2a, w2b, b2b, wt, bt) = params
    c0 = d1 + d2          # constant-1 lane in the packed input
    c1 = 2 * H1           # = 32, constant-1 lane after layer 1
    c2 = 2 * H2           # = 64, constant-1 lane after layer 2
    assert c0 + 1 <= LANES

    W1 = jnp.zeros((LANES, LANES), jnp.float32)
    W1 = W1.at[:d1, :H1].set(w1a)
    W1 = W1.at[d1:c0, H1:2 * H1].set(w2a)
    W1 = W1.at[c0, :H1].set(b1a)
    W1 = W1.at[c0, H1:2 * H1].set(b2a)
    W1 = W1.at[c0, c1].set(1.0)                      # propagate the constant lane

    W2 = jnp.zeros((LANES, LANES), jnp.float32)
    W2 = W2.at[:H1, :H2].set(w1b)
    W2 = W2.at[H1:2 * H1, H2:2 * H2].set(w2b)
    W2 = W2.at[c1, :H2].set(b1b)
    W2 = W2.at[c1, H2:2 * H2].set(b2b)
    W2 = W2.at[c1, c2].set(1.0)                      # propagate the constant lane

    W3 = jnp.zeros((LANES, LANES), jnp.float32)
    W3 = W3.at[:2 * H2, :OUT].set(wt)
    W3 = W3.at[c2, :OUT].set(bt)

    return jnp.stack([W1, W2, W3]).astype(dtype)     # (3, 128, 128)


def _choose_block_b(B: int, tile_cap: int = TILE_CAP) -> int:
    """Batch tile: big enough to amortize weight pushes, >=2 blocks at B>=16 for v7x dual-TC."""
    b8 = -(-B // 8) * 8
    if B < 16:
        return b8
    half = -(-(-(-B // 2)) // 8) * 8                 # round_up(cdiv(B, 2), 8)
    return min(tile_cap, half)


def complex_module_forward(x1, x2, w_slab):
    """Fused forward. `w_slab` is the precomputed output of pack_params (built once at init)."""
    B, d1 = x1.shape
    d2 = x2.shape[1]
    assert d1 + d2 + 1 <= LANES, "packed input (+bias lane) must fit in one lane group"

    block_b = _choose_block_b(B)
    BM = pl.cdiv(B, block_b) * block_b

    # Single fused activation pack: [x1 | x2 | 1] then one zero-pad over lanes + batch.
    xc = jnp.concatenate([x1, x2, jnp.ones((B, 1), x1.dtype)], axis=1)
    x = jnp.pad(xc, ((0, BM - B), (0, LANES - xc.shape[1]))).astype(jnp.float32)

    out = pl.pallas_call(
        fused_mlp_kernel,
        out_shape=jax.ShapeDtypeStruct((BM, LANES), jnp.float32),
        grid=(BM // block_b,),
        in_specs=[
            pl.BlockSpec((block_b, LANES), lambda i: (i, 0)),       # activations: tiled over batch
            pl.BlockSpec((3, LANES, LANES), lambda i: (0, 0, 0)),   # weight slab: resident
        ],
        out_specs=pl.BlockSpec((block_b, LANES), lambda i: (i, 0)),
        compiler_params=pltpu.CompilerParams(
            dimension_semantics=("parallel",)),   # shards batch blocks across v7x's two TCs
    )(x, w_slab)

    # Consumers that can take the padded (BM, 128) slab may skip this slice.
    return out[:B, :OUT]


def init_params(key, d1, d2):
    """Deterministic init; weights stored [in, out] (transposed vs torch.nn.Linear)."""
    ks = jax.random.split(key, 5)

    def lin(k, fan_in, fan_out):
        kw, kb = jax.random.split(k)
        bound = 1.0 / jnp.sqrt(fan_in)
        w = jax.random.uniform(kw, (fan_in, fan_out), jnp.float32, -bound, bound)
        b = jax.random.uniform(kb, (fan_out,), jnp.float32, -bound, bound)
        return w, b

    w1a, b1a = lin(ks[0], d1, H1)
    w1b, b1b = lin(ks[1], H1, H2)
    w2a, b2a = lin(ks[2], d2, H1)
    w2b, b2b = lin(ks[3], H1, H2)
    wt, bt = lin(ks[4], 2 * H2, OUT)
    return (w1a, b1a, w1b, b1b, w2a, b2a, w2b, b2b, wt, bt)


def reference_forward(x1, x2, params):
    """Pure-JAX reference matching the PyTorch forward exactly."""
    (w1a, b1a, w1b, b1b, w2a, b2a, w2b, b2b, wt, bt) = params
    o1 = jnp.maximum(x1 @ w1a + b1a, 0.0)
    o1 = jnp.maximum(o1 @ w1b + b1b, 0.0)
    o2 = jnp.maximum(x2 @ w2a + b2a, 0.0)
    o2 = jnp.maximum(o2 @ w2b + b2b, 0.0)
    cat = jnp.concatenate([o1, o2], axis=1)
    return jnp.maximum(cat @ wt + bt, 0.0)


if __name__ == "__main__":
    batch = 8
    input_size_one = 24
    input_size_two = 16

    key = jax.random.PRNGKey(0)
    k_p, k_x1, k_x2 = jax.random.split(key, 3)
    params = init_params(k_p, input_size_one, input_size_two)
    x1 = jax.random.normal(k_x1, (batch, input_size_one), jnp.float32)
    x2 = jax.random.normal(k_x2, (batch, input_size_two), jnp.float32)

    ref = reference_forward(x1, x2, params)

    # One-time packing, hoisted out of the jitted forward (was the dominant per-call cost).
    w_slab_f32 = jax.block_until_ready(pack_params(params, input_size_one, input_size_two))

    fwd = jax.jit(complex_module_forward)
    out = jax.block_until_ready(fwd(x1, x2, w_slab_f32))
    assert out.shape == (batch, OUT), out.shape
    assert jnp.allclose(out, ref, atol=1e-5, rtol=1e-5), "f32 kernel mismatch vs reference"

    # Opt-in bf16 weight/activation path (halves MXU passes + weight/activation traffic on
    # v6e/v7x); accumulation stays f32, tolerance must be relaxed.
    w_slab_bf16 = jax.block_until_ready(
        pack_params(params, input_size_one, input_size_two, dtype=jnp.bfloat16))
    out_bf16 = jax.block_until_ready(fwd(x1, x2, w_slab_bf16))
    assert out_bf16.shape == (batch, OUT), out_bf16.shape
    assert jnp.allclose(out_bf16, ref, atol=1e-1, rtol=5e-2), "bf16 kernel drifted too far"

    print("KERNEL_OK")
</pallas_src>

<mosaic_0001>
module attributes {stable_mosaic.version = 11 : i64} {
  func.func @fused_mlp_kernel(%arg0: i32, %arg1: memref<8x128xf32, #tpu.memory_space<vmem>>, %arg2: memref<3x128x128xf32, #tpu.memory_space<vmem>>, %arg3: memref<8x128xf32, #tpu.memory_space<vmem>>) attributes {dimension_semantics = [#tpu.dimension_semantics<parallel>], iteration_bounds = array<i64: 1>, scalar_prefetch = 0 : i64, scratch_operands = 0 : i64, tpu.core_type = #tpu.core_type<tc>, window_params = [{transform_indices = @transform_0, window_bounds = array<i64: 8, 128>}, {pipeline_mode = #tpu.pipeline_mode<synchronous>, transform_indices = @transform_1, window_bounds = array<i64: 3, 128, 128>}, {transform_indices = @transform_2, window_bounds = array<i64: 8, 128>}]} {
    %c0 = arith.constant 0 : index
    %c0_0 = arith.constant 0 : index
    %0 = vector.load %arg1[%c0, %c0_0] : memref<8x128xf32, #tpu.memory_space<vmem>>, vector<8x128xf32>
    %c0_1 = arith.constant 0 : index
    %c0_2 = arith.constant 0 : index
    %c0_3 = arith.constant 0 : index
    %1 = vector.load %arg2[%c0_1, %c0_2, %c0_3] : memref<3x128x128xf32, #tpu.memory_space<vmem>>, vector<1x128x128xf32>
    %2 = vector.shape_cast %1 : vector<1x128x128xf32> to vector<128x128xf32>
    %cst = arith.constant dense<0.000000e+00> : vector<8x128xf32>
    %3 = tpu.matmul %0, %2, %cst {dimension_numbers = #tpu.dot_dimension_numbers<[1], [0], [0], [1], [0, 0, 1, 1], [], []>} : vector<8x128xf32>, vector<128x128xf32>, vector<8x128xf32> -> vector<8x128xf32>
    %cst_4 = arith.constant 0.000000e+00 : f32
    %4 = vector.broadcast %cst_4 : f32 to vector<8x128xf32>
    %5 = arith.maximumf %3, %4 : vector<8x128xf32>
    %c1 = arith.constant 1 : index
    %c0_5 = arith.constant 0 : index
    %c0_6 = arith.constant 0 : index
    %6 = vector.load %arg2[%c1, %c0_5, %c0_6] : memref<3x128x128xf32, #tpu.memory_space<vmem>>, vector<1x128x128xf32>
    %7 = vector.shape_cast %6 : vector<1x128x128xf32> to vector<128x128xf32>
    %cst_7 = arith.constant dense<0.000000e+00> : vector<8x128xf32>
    %8 = tpu.matmul %5, %7, %cst_7 {dimension_numbers = #tpu.dot_dimension_numbers<[1], [0], [0], [1], [0, 0, 1, 1], [], []>} : vector<8x128xf32>, vector<128x128xf32>, vector<8x128xf32> -> vector<8x128xf32>
    %cst_8 = arith.constant 0.000000e+00 : f32
    %9 = vector.broadcast %cst_8 : f32 to vector<8x128xf32>
    %10 = arith.maximumf %8, %9 : vector<8x128xf32>
    %c2 = arith.constant 2 : index
    %c0_9 = arith.constant 0 : index
    %c0_10 = arith.constant 0 : index
    %11 = vector.load %arg2[%c2, %c0_9, %c0_10] : memref<3x128x128xf32, #tpu.memory_space<vmem>>, vector<1x128x128xf32>
    %12 = vector.shape_cast %11 : vector<1x128x128xf32> to vector<128x128xf32>
    %cst_11 = arith.constant dense<0.000000e+00> : vector<8x128xf32>
    %13 = tpu.matmul %10, %12, %cst_11 {dimension_numbers = #tpu.dot_dimension_numbers<[1], [0], [0], [1], [0, 0, 1, 1], [], []>} : vector<8x128xf32>, vector<128x128xf32>, vector<8x128xf32> -> vector<8x128xf32>
    %cst_12 = arith.constant 0.000000e+00 : f32
    %14 = vector.broadcast %cst_12 : f32 to vector<8x128xf32>
    %15 = arith.maximumf %13, %14 : vector<8x128xf32>
    %c0_13 = arith.constant 0 : index
    %c0_14 = arith.constant 0 : index
    %16 = vector.load %arg3[%c0_13, %c0_14] : memref<8x128xf32, #tpu.memory_space<vmem>>, vector<8x128xf32>
    tpu.vector_store %arg3[%c0_13, %c0_14], %15 {strides = array<i32>} : memref<8x128xf32, #tpu.memory_space<vmem>>, vector<8x128xf32>,
    return
  }
  func.func @transform_0(%arg0: i32) -> (i32, i32) {
    %c0_i32 = arith.constant 0 : i32
    %c0_i32_0 = arith.constant 0 : i32
    return %arg0, %c0_i32 : i32, i32
  }
  func.func @transform_1(%arg0: i32) -> (i32, i32, i32) {
    %c0_i32 = arith.constant 0 : i32
    %c0_i32_0 = arith.constant 0 : i32
    %c0_i32_1 = arith.constant 0 : i32
    %c0_i32_2 = arith.constant 0 : i32
    return %c0_i32, %c0_i32_0, %c0_i32_1 : i32, i32, i32
  }
  func.func @transform_2(%arg0: i32) -> (i32, i32) {
    %c0_i32 = arith.constant 0 : i32
    %c0_i32_0 = arith.constant 0 : i32
    return %arg0, %c0_i32 : i32, i32
  }
}

</mosaic_0001>

<llo_original>
// kernel: complex_module_forward.1
$region0: #{complex_module_forward.1}
  #allocation0 [shape = 'u32[]', space=smem, size = 0x4, offset = 0x4, fixed_abs, tag = 'smem constant byte address 0x4 - core index']
  #allocation1 [shape = 'u32[72,128]{1,0:T(1,128)}', space=vmem, size = 0x9000, scoped, tag = 'internal scratch']
  %s0 = inlined_call_operand.vmem [shape: f32[8,128], index: 0, kind: input, shape index: {}]
  %s1 = inlined_call_operand.hbm [shape: f32[3,128,128], index: 1, kind: input, shape index: {}]
  %s2 = inlined_call_operand.hbm [shape: f32[8,128], index: 2, kind: output, shape index: {}]
  %s3 = sld [smem:[#allocation0]]
  $region22: #{complex_module_forward.1} parent=0
    _
  %s5 = ssub.s32 1, %s3
  %s6 = scalar_select 0, %s5, %s3
  $region1: #{complex_module_forward.1} parent=0
    #allocation2 [shape = 'u8[196608]{0}', space=vmem, size = 0x30000, scoped, tag = 'input window, operand 1, single buffered']
    #allocation3 [shape = 's32[1]{0}', space=sflag, size = 0x4, scoped, tag = 'scoped memory for complex_module_forward.1']
    #allocation4 [shape = 's32[1]{0}', space=sflag, size = 0x4, scoped, tag = 'scoped memory for complex_module_forward.1']
    #allocation5 [shape = 'u8[4096]{0}', space=vmem, size = 0x1000, scoped, tag = 'output window, operand 0, single buffered']
    %7 = vsyncpa [#allocation3], 0
    %8 = vsyncpa [#allocation4], 0
    // Predicated region
    $region2: #{complex_module_forward.1} parent=1 // pred_check
      _
    $region3: #{complex_module_forward.1} parent=1 // pred_check_branch
      %10 = sbr.rel (0) target = $region5
    $region4: #{complex_module_forward.1} parent=1 // pred_region
      _
    $region5: #{complex_module_forward.1} parent=1 // pred_fallthru
      _
    // Predicated region
    $region6: #{complex_module_forward.1} parent=1 // pred_check
      _
    $region7: #{complex_module_forward.1} parent=1 // pred_check_branch
      %12 = sbr.rel (0) target = $region9
    $region8: #{complex_module_forward.1} parent=1 // pred_region
      %14 = vsyncadd [#allocation3], 0
      %s15 = sshll.u32 %s1, 4
      %s16 = int_to_ptr.hbm [resolvable:$true] %s15
      %s17 = sshll.u32 [#allocation2], 4
      %s18 = int_to_ptr.vmem [resolvable:$true] %s17
      %23 = dma.hbm_to_vmem [thread:$0]  %s16, 6144, %s18, [#allocation3], 128, 128, 8
    $region9: #{complex_module_forward.1} parent=1 // pred_fallthru
      _
    // Predicated region
    $region10: #{complex_module_forward.1} parent=1 // pred_check
      _
    $region11: #{complex_module_forward.1} parent=1 // pred_check_branch
      %25 = sbr.rel (0) target = $region13
    $region12: #{complex_module_forward.1} parent=1 // pred_region
      %27 = dma.done [#allocation3], 6144
    $region13: #{complex_module_forward.1} parent=1 // pred_fallthru
      _
    %v28 = vld [vmem:[%s0] sm:$0xff]
    %v29 = vld [vmem:[#allocation2] sm:$0xff]
    %v30 = vld [vmem:[#allocation2 + $0x8] sm:$0xff]
    %v31 = vld [vmem:[#allocation2 + $0x10] sm:$0xff]
    %v32 = vld [vmem:[#allocation2 + $0x18] sm:$0xff]
    %v33 = vld [vmem:[#allocation2 + $0x20] sm:$0xff]
    %v34 = vld [vmem:[#allocation2 + $0x28] sm:$0xff]
    %v35 = vld [vmem:[#allocation2 + $0x30] sm:$0xff]
    %v36 = vld [vmem:[#allocation2 + $0x38] sm:$0xff]
    %v37 = vld [vmem:[#allocation2 + $0x40] sm:$0xff]
    %v38 = vld [vmem:[#allocation2 + $0x48] sm:$0xff]
    %v39 = vld [vmem:[#allocation2 + $0x50] sm:$0xff]
    %v40 = vld [vmem:[#allocation2 + $0x58] sm:$0xff]
    %v41 = vld [vmem:[#allocation2 + $0x60] sm:$0xff]
    %v42 = vld [vmem:[#allocation2 + $0x68] sm:$0xff]
    %v43 = vld [vmem:[#allocation2 + $0x70] sm:$0xff]
    %v44 = vld [vmem:[#allocation2 + $0x78] sm:$0xff]
    %45 = vmatpush.msra.mxu0 %v44
    %46 = vmatpush.msra.mxu0 %v43
    %47 = vmatpush.msra.mxu0 %v42
    %48 = vmatpush.msra.mxu0 %v41
    %49 = vmatpush.msra.mxu0 %v40
    %50 = vmatpush.msra.mxu0 %v39
    %51 = vmatpush.msra.mxu0 %v38
    %52 = vmatpush.msra.mxu0 %v37
    %53 = vmatpush.msra.mxu0 %v36
    %54 = vmatpush.msra.mxu0 %v35
    %55 = vmatpush.msra.mxu0 %v34
    %56 = vmatpush.msra.mxu0 %v33
    %57 = vmatpush.msra.mxu0 %v32
    %58 = vmatpush.msra.mxu0 %v31
    %59 = vmatpush.msra.mxu0 %v30
    %60 = vmatpush.msra.mxu0 %v29
    %61 = vmatmul.f32.gmra.mxu0 %v28
    %v62 = vpop.f32.mrf.mxu0
    %v63 = vadd.f32 0.0, %v62
    %64 = vdwg.mxu0
    %v65 = vmax.f32 %v63, 0.0
    %s66 = scalar_lea.vmem [#allocation2], 128
    %v67 = vld [vmem:[%s66] sm:$0xff]
    %v68 = vld [vmem:[%s66 + $0x8] sm:$0xff]
    %v69 = vld [vmem:[%s66 + $0x10] sm:$0xff]
    %v70 = vld [vmem:[%s66 + $0x18] sm:$0xff]
    %v71 = vld [vmem:[%s66 + $0x20] sm:$0xff]
    %v72 = vld [vmem:[%s66 + $0x28] sm:$0xff]
    %v73 = vld [vmem:[%s66 + $0x30] sm:$0xff]
    %v74 = vld [vmem:[%s66 + $0x38] sm:$0xff]
    %v75 = vld [vmem:[%s66 + $0x40] sm:$0xff]
    %v76 = vld [vmem:[%s66 + $0x48] sm:$0xff]
    %v77 = vld [vmem:[%s66 + $0x50] sm:$0xff]
    %v78 = vld [vmem:[%s66 + $0x58] sm:$0xff]
    %v79 = vld [vmem:[%s66 + $0x60] sm:$0xff]
    %v80 = vld [vmem:[%s66 + $0x68] sm:$0xff]
    %v81 = vld [vmem:[%s66 + $0x70] sm:$0xff]
    %v82 = vld [vmem:[%s66 + $0x78] sm:$0xff]
    %83 = vmatpush.msra.mxu0 %v82
    %84 = vmatpush.msra.mxu0 %v81
    %85 = vmatpush.msra.mxu0 %v80
    %86 = vmatpush.msra.mxu0 %v79
    %87 = vmatpush.msra.mxu0 %v78
    %88 = vmatpush.msra.mxu0 %v77
    %89 = vmatpush.msra.mxu0 %v76
    %90 = vmatpush.msra.mxu0 %v75
    %91 = vmatpush.msra.mxu0 %v74
    %92 = vmatpush.msra.mxu0 %v73
    %93 = vmatpush.msra.mxu0 %v72
    %94 = vmatpush.msra.mxu0 %v71
    %95 = vmatpush.msra.mxu0 %v70
    %96 = vmatpush.msra.mxu0 %v69
    %97 = vmatpush.msra.mxu0 %v68
    %98 = vmatpush.msra.mxu0 %v67
    %99 = vmatmul.f32.gmra.mxu0 %v65
    %v100 = vpop.f32.mrf.mxu0
    %v101 = vadd.f32 0.0, %v100
    %102 = vdwg.mxu0
    %v103 = vmax.f32 %v101, 0.0
    %s104 = scalar_lea.vmem [#allocation2], 256
    %v105 = vld [vmem:[%s104] sm:$0xff]
    %v106 = vld [vmem:[%s104 + $0x8] sm:$0xff]
    %v107 = vld [vmem:[%s104 + $0x10] sm:$0xff]
    %v108 = vld [vmem:[%s104 + $0x18] sm:$0xff]
    %v109 = vld [vmem:[%s104 + $0x20] sm:$0xff]
    %v110 = vld [vmem:[%s104 + $0x28] sm:$0xff]
    %v111 = vld [vmem:[%s104 + $0x30] sm:$0xff]
    %v112 = vld [vmem:[%s104 + $0x38] sm:$0xff]
    %v113 = vld [vmem:[%s104 + $0x40] sm:$0xff]
    %v114 = vld [vmem:[%s104 + $0x48] sm:$0xff]
    %v115 = vld [vmem:[%s104 + $0x50] sm:$0xff]
    %v116 = vld [vmem:[%s104 + $0x58] sm:$0xff]
    %v117 = vld [vmem:[%s104 + $0x60] sm:$0xff]
    %v118 = vld [vmem:[%s104 + $0x68] sm:$0xff]
    %v119 = vld [vmem:[%s104 + $0x70] sm:$0xff]
    %v120 = vld [vmem:[%s104 + $0x78] sm:$0xff]
    %121 = vmatpush.msra.mxu0 %v120
    %122 = vmatpush.msra.mxu0 %v119
    %123 = vmatpush.msra.mxu0 %v118
    %124 = vmatpush.msra.mxu0 %v117
    %125 = vmatpush.msra.mxu0 %v116
    %126 = vmatpush.msra.mxu0 %v115
    %127 = vmatpush.msra.mxu0 %v114
    %128 = vmatpush.msra.mxu0 %v113
    %129 = vmatpush.msra.mxu0 %v112
    %130 = vmatpush.msra.mxu0 %v111
    %131 = vmatpush.msra.mxu0 %v110
    %132 = vmatpush.msra.mxu0 %v109
    %133 = vmatpush.msra.mxu0 %v108
    %134 = vmatpush.msra.mxu0 %v107
    %135 = vmatpush.msra.mxu0 %v106
    %136 = vmatpush.msra.mxu0 %v105
    %137 = vmatmul.f32.gmra.mxu0 %v103
    %v138 = vpop.f32.mrf.mxu0
    %v139 = vadd.f32 0.0, %v138
    %140 = vdwg.mxu0
    %v141 = vmax.f32 %v139, 0.0
    %142 = vst [vmem:[#allocation5] sm:$0xff] %v141
    // Predicated region
    $region14: #{complex_module_forward.1} parent=1 // pred_check
      _
    $region15: #{complex_module_forward.1} parent=1 // pred_check_branch
      %144 = sbr.rel (0) target = $region17
    $region16: #{complex_module_forward.1} parent=1 // pred_region
      %146 = vsyncadd [#allocation4], 0
      %s148 = sshll.u32 [#allocation5], 4
      %s149 = int_to_ptr.vmem [resolvable:$true] %s148
      %s150 = sshll.u32 %s2, 4
      %s151 = int_to_ptr.hbm [resolvable:$true] %s150
      %153 = dma.vmem_to_hbm [thread:$0]  %s149, 128, %s151, [#allocation4]
    $region17: #{complex_module_forward.1} parent=1 // pred_fallthru
      _
    // Predicated region
    $region18: #{complex_module_forward.1} parent=1 // pred_check
      _
    $region19: #{complex_module_forward.1} parent=1 // pred_check_branch
      %155 = sbr.rel (0) target = $region21
    $region20: #{complex_module_forward.1} parent=1 // pred_region
      %157 = dma.done [#allocation4], 128
    $region21: #{complex_module_forward.1} parent=1 // pred_fallthru
      _
    %158 = vsyncpa [#allocation3], 1
    %159 = vsyncpa [#allocation4], 1

</llo_original>
